<compile_context>
chip_gen: v7x
topology: tpu7x:2x2x1
jax: 0.10.0
libtpu: 0.0.40
codegen_flags: <defaults>
</compile_context>

<pallas_src>
import jax
import jax.numpy as jnp
from jax.experimental import pallas as pl
from jax.experimental.pallas import tpu as pltpu


def _hswish_kernel(x_ref, o_ref):
    x = x_ref[...]
    # h_sigmoid(x) = relu6(x + 3) / 6 ; h_swish(x) = x * h_sigmoid(x)
    hs = jnp.clip(x + 3.0, 0.0, 6.0) * (1.0 / 6.0)
    o_ref[...] = (x * hs).astype(o_ref.dtype)


_LANE = 128
# native sublane packing per element byte-width (f32 -> 8, bf16/f16 -> 16, i8/fp8 -> 32)
_SUBLANES = {4: 8, 2: 16, 1: 32}


def h_swish(x, *, target_block_bytes=2 * 1024 * 1024):
    """Elementwise h_swish. Matches PyTorch hardswish semantics."""
    orig_shape = x.shape
    dtype = x.dtype
    n = x.size
    if n == 0:
        return x

    itemsize = jnp.dtype(dtype).itemsize
    sublanes = _SUBLANES.get(itemsize, 8)

    flat = jnp.ravel(x)

    # Widest lane-dense slab width that divides n exactly (avoids any
    # pad / final-slice HBM copies for typical NCHW activation sizes).
    width = None
    for w in (8192, 4096, 2048, 1024, 512, 256, _LANE):
        if n % w == 0:
            width = w
            break

    padded = False
    if width is None:
        # Irregular size: single pad up to a native-tile multiple.
        width = 512
        tile_elems = sublanes * width
        n_pad = pl.cdiv(n, tile_elems) * tile_elems
        flat = jnp.pad(flat, (0, n_pad - n))
        padded = True
    else:
        n_pad = n

    rows = n_pad // width
    x2d = flat.reshape(rows, width)

    # Block sizing: big, lane-dense blocks to amortize per-grid-step overhead,
    # but capped so 2x(in+out) double buffers stay well under v5e's scoped VMEM.
    if rows * width * itemsize <= target_block_bytes or rows <= sublanes:
        tr = rows  # whole slab in one (full-extent) block — always legal
    else:
        tr = max(
            sublanes,
            (target_block_bytes // (width * itemsize)) // sublanes * sublanes,
        )
        tr = min(tr, rows)

    grid = (pl.cdiv(rows, tr),)  # partial final block handled by Pallas

    out2d = pl.pallas_call(
        _hswish_kernel,
        out_shape=jax.ShapeDtypeStruct((rows, width), dtype),
        grid_spec=pltpu.PrefetchScalarGridSpec(
            num_scalar_prefetch=0,
            grid=grid,
            in_specs=[pl.BlockSpec((tr, width), lambda i: (i, 0))],
            out_specs=pl.BlockSpec((tr, width), lambda i: (i, 0)),
        ),
        compiler_params=pltpu.CompilerParams(
            dimension_semantics=("parallel",),
        ),
    )(x2d)

    if padded:
        return out2d.reshape(-1)[:n].reshape(orig_shape)
    return out2d.reshape(orig_shape)


def _reference_hswish(x):
    return x * (jnp.clip(x + 3.0, 0.0, 6.0) / 6.0)


if __name__ == "__main__":
    key = jax.random.PRNGKey(0)

    # Typical NCHW activation: batch=2, channels=4, 16x16 (n divisible by 128
    # -> zero-copy, no-pad path).
    x = jax.random.normal(key, (2, 4, 16, 16), dtype=jnp.float32) * 4.0
    y = h_swish(x)
    jax.block_until_ready(y)
    y_ref = _reference_hswish(x)
    assert y.shape == x.shape and y.dtype == x.dtype
    assert jnp.allclose(y, y_ref, atol=1e-6, rtol=1e-6)

    # Irregular size (exercises the padded / partial-tile fallback path).
    x2 = jax.random.normal(jax.random.PRNGKey(1), (3, 5, 7), dtype=jnp.float32) * 4.0
    y2 = h_swish(x2)
    jax.block_until_ready(y2)
    assert y2.shape == x2.shape and y2.dtype == x2.dtype
    assert jnp.allclose(y2, _reference_hswish(x2), atol=1e-6, rtol=1e-6)

    # bf16 path (exercises 16-sublane granularity).
    x3 = (jax.random.normal(jax.random.PRNGKey(2), (4, 8, 32), dtype=jnp.float32) * 4.0
          ).astype(jnp.bfloat16)
    y3 = h_swish(x3)
    jax.block_until_ready(y3)
    assert y3.shape == x3.shape and y3.dtype == x3.dtype
    assert jnp.allclose(y3.astype(jnp.float32),
                        _reference_hswish(x3.astype(jnp.float32)),
                        atol=3e-2, rtol=3e-2)

    print("KERNEL_OK")
</pallas_src>

<mosaic_0001>
module attributes {stable_mosaic.version = 11 : i64} {
  func.func @_hswish_kernel(%arg0: i32, %arg1: memref<1x2048xf32, #tpu.memory_space<vmem>>, %arg2: memref<1x2048xf32, #tpu.memory_space<vmem>>) attributes {dimension_semantics = [#tpu.dimension_semantics<parallel>], iteration_bounds = array<i64: 1>, scalar_prefetch = 0 : i64, scratch_operands = 0 : i64, tpu.core_type = #tpu.core_type<tc>, window_params = [{transform_indices = @transform_0, window_bounds = array<i64: 1, 2048>}, {transform_indices = @transform_1, window_bounds = array<i64: 1, 2048>}]} {
    %c0 = arith.constant 0 : index
    %c0_0 = arith.constant 0 : index
    %0 = vector.load %arg1[%c0, %c0_0] : memref<1x2048xf32, #tpu.memory_space<vmem>>, vector<1x2048xf32>
    %cst = arith.constant 3.000000e+00 : f32
    %1 = vector.broadcast %cst : f32 to vector<1x2048xf32>
    %2 = arith.addf %0, %1 : vector<1x2048xf32>
    %cst_1 = arith.constant 0.000000e+00 : f32
    %cst_2 = arith.constant 6.000000e+00 : f32
    %3 = vector.broadcast %cst_1 : f32 to vector<1x2048xf32>
    %4 = arith.maximumf %3, %2 : vector<1x2048xf32>
    %5 = vector.broadcast %cst_2 : f32 to vector<1x2048xf32>
    %6 = arith.minimumf %5, %4 : vector<1x2048xf32>
    %cst_3 = arith.constant 0.166666672 : f32
    %7 = vector.broadcast %cst_3 : f32 to vector<1x2048xf32>
    %8 = arith.mulf %6, %7 : vector<1x2048xf32>
    %9 = arith.mulf %0, %8 : vector<1x2048xf32>
    %c0_4 = arith.constant 0 : index
    %c0_5 = arith.constant 0 : index
    %10 = vector.load %arg2[%c0_4, %c0_5] : memref<1x2048xf32, #tpu.memory_space<vmem>>, vector<1x2048xf32>
    tpu.vector_store %arg2[%c0_4, %c0_5], %9 {strides = array<i32>} : memref<1x2048xf32, #tpu.memory_space<vmem>>, vector<1x2048xf32>,
    return
  }
  func.func @transform_0(%arg0: i32) -> (i32, i32) {
    %c0_i32 = arith.constant 0 : i32
    %c0_i32_0 = arith.constant 0 : i32
    return %arg0, %c0_i32 : i32, i32
  }
  func.func @transform_1(%arg0: i32) -> (i32, i32) {
    %c0_i32 = arith.constant 0 : i32
    %c0_i32_0 = arith.constant 0 : i32
    return %arg0, %c0_i32 : i32, i32
  }
}

</mosaic_0001>

<llo_original>
// kernel: tpu_custom_call.1
$region0: #{tpu_custom_call.1}
  #allocation0 [shape = 'u32[]', space=smem, size = 0x4, offset = 0x4, fixed_abs, tag = 'smem constant byte address 0x4 - core index']
  #allocation1 [shape = 'u32[144,128]{1,0:T(1,128)}', space=vmem, size = 0x12000, scoped, tag = 'internal scratch']
  %s0 = inlined_call_operand.hbm [shape: f32[1,2048], index: 0, kind: input, shape index: {}]
  %s1 = inlined_call_operand.hbm [shape: f32[1,2048], index: 1, kind: output, shape index: {}]
  %s2 = sld [smem:[#allocation0]]
  $region18: #{tpu_custom_call.1} parent=0
    _
  %s4 = ssub.s32 1, %s2
  %s5 = scalar_select 0, %s4, %s2
  $region1: #{tpu_custom_call.1} parent=0
    #allocation2 [shape = 'u8[8192]{0}', space=vmem, size = 0x2000, scoped, tag = 'input window, operand 0, single buffered']
    #allocation3 [shape = 's32[1]{0}', space=sflag, size = 0x4, scoped, tag = 'scoped memory for tpu_custom_call.1']
    #allocation4 [shape = 's32[1]{0}', space=sflag, size = 0x4, scoped, tag = 'scoped memory for tpu_custom_call.1']
    #allocation5 [shape = 'u8[8192]{0}', space=vmem, size = 0x2000, scoped, tag = 'output window, operand 0, single buffered']
    %6 = vsyncpa [#allocation3], 0
    %7 = vsyncpa [#allocation4], 0
    // Predicated region
    $region2: #{tpu_custom_call.1} parent=1 // pred_check
      _
    $region3: #{tpu_custom_call.1} parent=1 // pred_check_branch
      %9 = sbr.rel (0) target = $region5
    $region4: #{tpu_custom_call.1} parent=1 // pred_region
      %s11 = ssub.s32 256, 256
      %12 = vsyncadd [#allocation3], %s11
      %s14 = sshll.u32 [#allocation2], 4
      %s15 = int_to_ptr.vmem [resolvable:$true] %s14
      %17 = dma.hbm_to_vmem [thread:$0]  %s0, 256, %s15, [#allocation3]
    $region5: #{tpu_custom_call.1} parent=1 // pred_fallthru
      _
    // Predicated region
    $region6: #{tpu_custom_call.1} parent=1 // pred_check
      _
    $region7: #{tpu_custom_call.1} parent=1 // pred_check_branch
      %19 = sbr.rel (0) target = $region9
    $region8: #{tpu_custom_call.1} parent=1 // pred_region
      %20 = dma.done [#allocation3], 256
    $region9: #{tpu_custom_call.1} parent=1 // pred_fallthru
      _
    %v21 = vld [vmem:[#allocation2] sm:$0xff]
    %v22 = vld [vmem:[#allocation2 + $0x8] sm:$0xff]
    %v23 = vadd.f32 %v21, 3.0
    %v24 = vadd.f32 %v22, 3.0
    %v25 = vmax.f32 %v23, 0.0
    %v26 = vmax.f32 %v24, 0.0
    %v27 = vmin.f32 %v25, 6.0
    %v28 = vmin.f32 %v26, 6.0
    %v29 = vmul.f32 %v27, 0.16666667
    %v30 = vmul.f32 %v28, 0.16666667
    %v31 = vmul.f32 %v21, %v29
    %v32 = vmul.f32 %v22, %v30
    %33 = vst [vmem:[#allocation5] sm:$0xff] %v31
    %34 = vst [vmem:[#allocation5 + $0x8] sm:$0xff] %v32
    // Predicated region
    $region10: #{tpu_custom_call.1} parent=1 // pred_check
      _
    $region11: #{tpu_custom_call.1} parent=1 // pred_check_branch
      %36 = sbr.rel (0) target = $region13
    $region12: #{tpu_custom_call.1} parent=1 // pred_region
      %s38 = ssub.s32 256, 256
      %39 = vsyncadd [#allocation4], %s38
      %s41 = sshll.u32 [#allocation5], 4
      %s42 = int_to_ptr.vmem [resolvable:$true] %s41
      %44 = dma.vmem_to_hbm [thread:$0]  %s42, 256, %s1, [#allocation4]
    $region13: #{tpu_custom_call.1} parent=1 // pred_fallthru
      _
    // Predicated region
    $region14: #{tpu_custom_call.1} parent=1 // pred_check
      _
    $region15: #{tpu_custom_call.1} parent=1 // pred_check_branch
      %46 = sbr.rel (0) target = $region17
    $region16: #{tpu_custom_call.1} parent=1 // pred_region
      %47 = dma.done [#allocation4], 256
    $region17: #{tpu_custom_call.1} parent=1 // pred_fallthru
      _
    %48 = vsyncpa [#allocation3], 1
    %49 = vsyncpa [#allocation4], 1

</llo_original>
